<compile_context>
chip_gen: v7x
topology: tpu7x:2x2x1
jax: 0.10.0
libtpu: 0.0.40
codegen_flags: <defaults>
</compile_context>

<pallas_src>
import jax
import jax.numpy as jnp
from jax.experimental import pallas as pl
from jax.experimental.pallas import tpu as pltpu

LANE = 128


def _pool_fc_kernel(h_ref, m_ref, cnt_ref, w_ref, b_ref, o_ref, acc_ref):
    # h_ref:   [TB, TS, H]   hidden-state tile (bf16 stream)
    # m_ref:   [TB, 1, TS]   attention-mask tile (bf16 stream; 0/1 exact in bf16)
    # cnt_ref: [TB, 1, 1]    clamped token counts (f32, precomputed in wrapper)
    # w_ref:   [H, 128]      fc weight (transposed, lane-padded), resident
    # b_ref:   [1, 128]      fc bias (lane-padded), resident
    # o_ref:   [TB, 1, 128]  output tile (written once, at the last sequence step)
    # acc_ref: [TB, H]       running masked sum (f32 scratch)
    s = pl.program_id(1)

    @pl.when(s == 0)
    def _init():
        acc_ref[...] = jnp.zeros_like(acc_ref)

    # Masked sum over this sequence tile as a batched MXU contraction with bf16
    # operands and f32 accumulation:  [TB, 1, TS] x [TB, TS, H] -> [TB, 1, H].
    part = jax.lax.dot_general(
        m_ref[...], h_ref[...],
        dimension_numbers=(((2,), (1,)), ((0,), (0,))),
        preferred_element_type=jnp.float32)
    acc_ref[...] += part[:, 0, :]

    @pl.when(s == pl.num_programs(1) - 1)
    def _finalize():
        denom = cnt_ref[...][:, 0, :]                       # [TB, 1] f32, >= 1e-9
        mean = acc_ref[...] / denom                         # [TB, H] f32
        out = jnp.dot(mean, w_ref[...],
                      preferred_element_type=jnp.float32) + b_ref[...]
        o_ref[...] = jnp.expand_dims(out, 1).astype(o_ref.dtype)


def _vmem_capacity_bytes():
    # Generation-aware VMEM capacity (v5e/v6e: 128 MiB, v7x: 64 MiB per TC).
    try:
        info = pltpu.get_tpu_info()
        cap = getattr(info, "vmem_capacity_bytes", None)
        if cap:
            return int(cap)
    except Exception:
        pass
    return 64 << 20  # conservative fallback (v7x per-TensorCore)


def _pick_batch_tile(B):
    # Largest divisor of B that is <= min(8, B // 2) so the "parallel" batch grid
    # axis is >= 2 whenever B >= 2 (keeps both v7x TensorCores busy).
    if B <= 1:
        return 1
    cap = min(8, B // 2)
    for tb in range(cap, 0, -1):
        if B % tb == 0:
            return tb
    return 1


def _pick_seq_tile(S, TB, H, itemsize, budget_bytes):
    # Largest sequence tile (multiple of 128) that divides S and keeps one input
    # buffer under budget; falls back to the full sequence for small / odd S.
    fallback = S
    for c in (2048, 1024, 512, 256, 128):
        if S % c == 0:
            fallback = c
            if TB * c * H * itemsize <= budget_bytes:
                return c
    return fallback


def custom_model_head(last_hidden_state, attention_mask, fc_weight_t, fc_bias,
                      *, seq_tile=None, batch_tile=None,
                      stream_dtype=jnp.bfloat16):
    """last_hidden_state: [B, S, H], attention_mask: [B, S],
       fc_weight_t: [H, n_out] (transposed PyTorch weight), fc_bias: [n_out]."""
    B, S, H = last_hidden_state.shape
    n_out = fc_weight_t.shape[1]

    # Stream activations + mask in bf16 (halves HBM bytes; MXU-native on all gens).
    h = last_hidden_state.astype(stream_dtype)
    mask3 = attention_mask.astype(stream_dtype).reshape(B, 1, S)
    # Exact token counts in f32 (torch.clamp(min=1e-9)), hoisted out of the kernel.
    cnt = jnp.maximum(jnp.sum(attention_mask.astype(jnp.float32), axis=1),
                      1e-9).reshape(B, 1, 1)
    itemsize = jnp.dtype(stream_dtype).itemsize

    TB = batch_tile if batch_tile is not None else _pick_batch_tile(B)
    assert B % TB == 0

    vmem_cap = _vmem_capacity_bytes()
    per_buf_budget = min(vmem_cap // 4, 48 << 20)   # ~16 MiB on v7x, 32 MiB on v5e/v6e
    TS = seq_tile if seq_tile is not None else _pick_seq_tile(
        S, TB, H, itemsize, per_buf_budget)
    assert S % TS == 0
    assert TS == S or TS % 128 == 0, "seq tile must be a multiple of 128 or the full sequence"

    # Lane-pad the tiny head so output stores / MXU N-dim are lane dense.
    n_pad = ((n_out + LANE - 1) // LANE) * LANE
    w_pad = jnp.zeros((H, n_pad), jnp.float32).at[:, :n_out].set(
        fc_weight_t.astype(jnp.float32))
    b_pad = jnp.zeros((1, n_pad), jnp.float32).at[:, :n_out].set(
        fc_bias.astype(jnp.float32))

    grid = (B // TB, S // TS)

    # Scoped VMEM: double-buffered streaming tiles + resident weights/output/scratch.
    # NOTE: the tiny mask/count tiles and default double-buffered weights are <<1%
    # of the h stream; resident-mask / single-buffered-weight tricks deliberately skipped.
    vmem_bytes = (2 * (TB * TS * H * itemsize)              # h double buffer
                  + 2 * (TB * TS * itemsize)                # mask double buffer
                  + 2 * (TB * 8 * 4)                        # count tiles (sublane-padded)
                  + 2 * (H * n_pad * 4 + 8 * n_pad * 4)     # weight / bias
                  + 2 * (TB * 8 * n_pad * 4)                # output tiles
                  + 8 * max(TB, 8) * H * 4                  # acc scratch (padded)
                  + (2 << 20))                              # headroom
    vmem_bytes = int(min(max(vmem_bytes, 8 << 20), vmem_cap * 3 // 4))

    out = pl.pallas_call(
        _pool_fc_kernel,
        out_shape=jax.ShapeDtypeStruct((B, 1, n_pad), jnp.float32),
        grid=grid,
        in_specs=[
            pl.BlockSpec((TB, TS, H), lambda b, s: (b, s, 0)),
            pl.BlockSpec((TB, 1, TS), lambda b, s: (b, 0, s)),
            pl.BlockSpec((TB, 1, 1), lambda b, s: (b, 0, 0)),
            pl.BlockSpec((H, n_pad), lambda b, s: (0, 0)),
            pl.BlockSpec((1, n_pad), lambda b, s: (0, 0)),
        ],
        out_specs=pl.BlockSpec((TB, 1, n_pad), lambda b, s: (b, 0, 0)),
        scratch_shapes=[pltpu.VMEM((TB, H), jnp.float32)],
        compiler_params=pltpu.CompilerParams(
            dimension_semantics=("parallel", "arbitrary"),
            vmem_limit_bytes=vmem_bytes),
    )(h, mask3, cnt, w_pad, b_pad)

    return out[:, 0, :n_out]


def reference(last_hidden_state, attention_mask, fc_weight_t, fc_bias):
    m = attention_mask[:, :, None].astype(jnp.float32)
    sum_emb = jnp.sum(last_hidden_state.astype(jnp.float32) * m, axis=1)
    sum_mask = jnp.clip(jnp.sum(m, axis=1), 1e-9, None)
    mean = sum_emb / sum_mask
    return mean @ fc_weight_t + fc_bias


if __name__ == "__main__":
    # TODO(synk): the AutoModel transformer backbone is not re-implemented in Pallas;
    # its output (last_hidden_state) is modeled as a random input tensor.
    INITIALIZER_RANGE = 0.02

    def run_case(B, S, H, n_out, key, seq_tile=None):
        k_h, k_w = jax.random.split(key)
        h = jax.random.normal(k_h, (B, S, H), dtype=jnp.float32)
        # Ragged attention mask: ones for a prefix of each row, zeros after.
        lengths = jnp.linspace(S, max(S // 3, 1), B).astype(jnp.int32)
        mask = (jnp.arange(S)[None, :] < lengths[:, None]).astype(jnp.float32)
        # fc init as in _init_weights: weight ~ N(0, initializer_range), bias = 0.
        w = INITIALIZER_RANGE * jax.random.normal(k_w, (n_out, H), dtype=jnp.float32)
        w_t = w.T
        b = jnp.zeros((n_out,), dtype=jnp.float32)

        out = custom_model_head(h, mask, w_t, b, seq_tile=seq_tile)
        out = jax.block_until_ready(out)
        assert out.shape == (B, n_out)

        # Exact check against a reference using the same bf16-quantized activations
        # the kernel streams; loose check against the pure-f32 reference.
        ref_bf16 = reference(h.astype(jnp.bfloat16).astype(jnp.float32), mask, w_t, b)
        ref_f32 = reference(h, mask, w_t, b)
        assert jnp.allclose(out, ref_bf16, atol=1e-4, rtol=1e-4), (out, ref_bf16)
        assert jnp.allclose(out, ref_f32, atol=3e-3, rtol=3e-3), (out, ref_f32)

    key = jax.random.PRNGKey(0)
    k1, k2 = jax.random.split(key)
    # Small shape: B=2 -> batch tile 1, grid (2, 1) (both TCs on the parallel axis).
    run_case(2, 8, 32, 6, k1)
    # Larger shape exercising batch tile > 1 and the sequence-tiled
    # accumulate/finalize path: B=4 -> TB=2, grid (2, 2).
    run_case(4, 512, 128, 6, k2, seq_tile=256)

    print("KERNEL_OK")
</pallas_src>

<mosaic_0001>
module attributes {stable_mosaic.version = 11 : i64} {
  func.func @_pool_fc_kernel(%arg0: i32, %arg1: i32, %arg2: memref<1x8x32xbf16, #tpu.memory_space<vmem>>, %arg3: memref<1x1x8xbf16, #tpu.memory_space<vmem>>, %arg4: memref<1x1x1xf32, #tpu.memory_space<vmem>>, %arg5: memref<32x128xf32, #tpu.memory_space<vmem>>, %arg6: memref<1x128xf32, #tpu.memory_space<vmem>>, %arg7: memref<1x1x128xf32, #tpu.memory_space<vmem>>, %arg8: memref<1x32xf32, #tpu.memory_space<vmem>>) attributes {dimension_semantics = [#tpu.dimension_semantics<parallel>, #tpu.dimension_semantics<arbitrary>], iteration_bounds = array<i64: 2, 1>, scalar_prefetch = 0 : i64, scratch_operands = 1 : i64, tpu.core_type = #tpu.core_type<tc>, window_params = [{transform_indices = @transform_0, window_bounds = array<i64: 1, 8, 32>}, {transform_indices = @transform_1, window_bounds = array<i64: 1, 1, 8>}, {transform_indices = @transform_2, window_bounds = array<i64: 1, 1, 1>}, {pipeline_mode = #tpu.pipeline_mode<synchronous>, transform_indices = @transform_3, window_bounds = array<i64: 32, 128>}, {pipeline_mode = #tpu.pipeline_mode<synchronous>, transform_indices = @transform_4, window_bounds = array<i64: 1, 128>}, {transform_indices = @transform_5, window_bounds = array<i64: 1, 1, 128>}]} {
    %c0_i32 = arith.constant 0 : i32
    %0 = arith.cmpi eq, %arg1, %c0_i32 : i32
    %1 = arith.extui %0 : i1 to i32
    %c0_i32_0 = arith.constant 0 : i32
    %2 = arith.cmpi ne, %1, %c0_i32_0 : i32
    scf.if %2 {
      %cst_12 = arith.constant 0.000000e+00 : f32
      %13 = vector.broadcast %cst_12 : f32 to vector<1x32xf32>
      %c0_13 = arith.constant 0 : index
      %c0_14 = arith.constant 0 : index
      %14 = vector.load %arg8[%c0_13, %c0_14] : memref<1x32xf32, #tpu.memory_space<vmem>>, vector<1x32xf32>
      tpu.vector_store %arg8[%c0_13, %c0_14], %13 {strides = array<i32>} : memref<1x32xf32, #tpu.memory_space<vmem>>, vector<1x32xf32>,
    } else {
    }
    %c0 = arith.constant 0 : index
    %c0_1 = arith.constant 0 : index
    %c0_2 = arith.constant 0 : index
    %3 = vector.load %arg3[%c0, %c0_1, %c0_2] : memref<1x1x8xbf16, #tpu.memory_space<vmem>>, vector<1x1x8xbf16>
    %c0_3 = arith.constant 0 : index
    %c0_4 = arith.constant 0 : index
    %c0_5 = arith.constant 0 : index
    %4 = vector.load %arg2[%c0_3, %c0_4, %c0_5] : memref<1x8x32xbf16, #tpu.memory_space<vmem>>, vector<1x8x32xbf16>
    %cst = arith.constant dense<0.000000e+00> : vector<1x1x32xf32>
    %5 = tpu.matmul %3, %4, %cst {dimension_numbers = #tpu.dot_dimension_numbers<[2], [1], [1], [2], [0, 0, 0, 1, 1, 2], [0], [0]>} : vector<1x1x8xbf16>, vector<1x8x32xbf16>, vector<1x1x32xf32> -> vector<1x1x32xf32>
    %c0_6 = arith.constant 0 : index
    %c0_7 = arith.constant 0 : index
    %6 = vector.load %arg8[%c0_6, %c0_7] : memref<1x32xf32, #tpu.memory_space<vmem>>, vector<1x32xf32>
    %7 = vector.shape_cast %5 : vector<1x1x32xf32> to vector<1x32xf32>
    %8 = arith.addf %6, %7 : vector<1x32xf32>
    %c0_8 = arith.constant 0 : index
    %c0_9 = arith.constant 0 : index
    %9 = vector.load %arg8[%c0_8, %c0_9] : memref<1x32xf32, #tpu.memory_space<vmem>>, vector<1x32xf32>
    tpu.vector_store %arg8[%c0_8, %c0_9], %8 {strides = array<i32>} : memref<1x32xf32, #tpu.memory_space<vmem>>, vector<1x32xf32>,
    %c0_i32_10 = arith.constant 0 : i32
    %10 = arith.cmpi eq, %arg1, %c0_i32_10 : i32
    %11 = arith.extui %10 : i1 to i32
    %c0_i32_11 = arith.constant 0 : i32
    %12 = arith.cmpi ne, %11, %c0_i32_11 : i32
    scf.if %12 {
      %c0_12 = arith.constant 0 : index
      %c0_13 = arith.constant 0 : index
      %c0_14 = arith.constant 0 : index
      %13 = vector.load %arg4[%c0_12, %c0_13, %c0_14] : memref<1x1x1xf32, #tpu.memory_space<vmem>>, vector<1x1x1xf32>
      %14 = vector.shape_cast %13 : vector<1x1x1xf32> to vector<1x1xf32>
      %c0_15 = arith.constant 0 : index
      %c0_16 = arith.constant 0 : index
      %15 = vector.load %arg8[%c0_15, %c0_16] : memref<1x32xf32, #tpu.memory_space<vmem>>, vector<1x32xf32>
      %16 = vector.broadcast %14 : vector<1x1xf32> to vector<1x32xf32>
      %17 = arith.divf %15, %16 : vector<1x32xf32>
      %c0_17 = arith.constant 0 : index
      %c0_18 = arith.constant 0 : index
      %18 = vector.load %arg5[%c0_17, %c0_18] : memref<32x128xf32, #tpu.memory_space<vmem>>, vector<32x128xf32>
      %cst_19 = arith.constant dense<0.000000e+00> : vector<1x128xf32>
      %19 = tpu.matmul %17, %18, %cst_19 {dimension_numbers = #tpu.dot_dimension_numbers<[1], [0], [0], [1], [0, 0, 1, 1], [], []>} : vector<1x32xf32>, vector<32x128xf32>, vector<1x128xf32> -> vector<1x128xf32>
      %c0_20 = arith.constant 0 : index
      %c0_21 = arith.constant 0 : index
      %20 = vector.load %arg6[%c0_20, %c0_21] : memref<1x128xf32, #tpu.memory_space<vmem>>, vector<1x128xf32>
      %21 = arith.addf %19, %20 : vector<1x128xf32>
      %22 = vector.shape_cast %21 : vector<1x128xf32> to vector<1x1x128xf32>
      %c0_22 = arith.constant 0 : index
      %c0_23 = arith.constant 0 : index
      %c0_24 = arith.constant 0 : index
      %23 = vector.load %arg7[%c0_22, %c0_23, %c0_24] : memref<1x1x128xf32, #tpu.memory_space<vmem>>, vector<1x1x128xf32>
      tpu.vector_store %arg7[%c0_22, %c0_23, %c0_24], %22 {strides = array<i32>} : memref<1x1x128xf32, #tpu.memory_space<vmem>>, vector<1x1x128xf32>,
    } else {
    }
    return
  }
  func.func @transform_0(%arg0: i32, %arg1: i32) -> (i32, i32, i32) {
    %c0_i32 = arith.constant 0 : i32
    %c0_i32_0 = arith.constant 0 : i32
    return %arg0, %arg1, %c0_i32 : i32, i32, i32
  }
  func.func @transform_1(%arg0: i32, %arg1: i32) -> (i32, i32, i32) {
    %c0_i32 = arith.constant 0 : i32
    %c0_i32_0 = arith.constant 0 : i32
    return %arg0, %c0_i32, %arg1 : i32, i32, i32
  }
  func.func @transform_2(%arg0: i32, %arg1: i32) -> (i32, i32, i32) {
    %c0_i32 = arith.constant 0 : i32
    %c0_i32_0 = arith.constant 0 : i32
    %c0_i32_1 = arith.constant 0 : i32
    return %arg0, %c0_i32, %c0_i32_0 : i32, i32, i32
  }
  func.func @transform_3(%arg0: i32, %arg1: i32) -> (i32, i32) {
    %c0_i32 = arith.constant 0 : i32
    %c0_i32_0 = arith.constant 0 : i32
    %c0_i32_1 = arith.constant 0 : i32
    return %c0_i32, %c0_i32_0 : i32, i32
  }
  func.func @transform_4(%arg0: i32, %arg1: i32) -> (i32, i32) {
    %c0_i32 = arith.constant 0 : i32
    %c0_i32_0 = arith.constant 0 : i32
    %c0_i32_1 = arith.constant 0 : i32
    return %c0_i32, %c0_i32_0 : i32, i32
  }
  func.func @transform_5(%arg0: i32, %arg1: i32) -> (i32, i32, i32) {
    %c0_i32 = arith.constant 0 : i32
    %c0_i32_0 = arith.constant 0 : i32
    %c0_i32_1 = arith.constant 0 : i32
    return %arg0, %c0_i32, %c0_i32_0 : i32, i32, i32
  }
}

</mosaic_0001>

<llo_original>
// kernel: tpu_custom_call.1
$region0: #{tpu_custom_call.1}
  #allocation0 [shape = 'u32[]', space=smem, size = 0x4, offset = 0x4, fixed_abs, tag = 'smem constant byte address 0x4 - core index']
  #allocation1 [shape = 'u32[144,128]{1,0:T(1,128)}', space=vmem, size = 0x12000, scoped, tag = 'internal scratch']
  #allocation2 [shape = 'f32[1,32]{1,0:T(1,128)}', space=vmem, size = 0x200, scoped, tag = 'scratch operand']
  %s0 = inlined_call_operand.hbm [shape: bf16[2,8,32], index: 0, kind: input, shape index: {}]
  %s1 = inlined_call_operand.vmem [shape: bf16[2,1,8], index: 1, kind: input, shape index: {}]
  %s2 = inlined_call_operand.vmem [shape: f32[2,1,1], index: 2, kind: input, shape index: {}]
  %s3 = inlined_call_operand.hbm [shape: f32[32,128], index: 3, kind: input, shape index: {}]
  %s4 = inlined_call_operand.vmem [shape: f32[1,128], index: 4, kind: input, shape index: {}]
  %s5 = inlined_call_operand.hbm [shape: f32[2,1,128], index: 5, kind: output, shape index: {}]
  %s6 = sld [smem:[#allocation0]]
  $region69: #{tpu_custom_call.1} parent=0
    _
  %s8 = ssub.s32 1, %s6
  %s9 = scalar_select 0, %s8, %s6
  $region1: #{tpu_custom_call.1} parent=0
    #allocation3 [shape = 'u8[4096]{0}', space=vmem, size = 0x1000, scoped, tag = 'input window, operand 0']
    #allocation4 [shape = 's32[2]{0}', space=sflag, size = 0x8, scoped, tag = 'scoped memory for tpu_custom_call.1']
    #allocation5 [shape = 's32[2]{0}', space=sflag, size = 0x8, scoped, tag = 'scoped memory for tpu_custom_call.1']
    #allocation6 [shape = 'u8[16384]{0}', space=vmem, size = 0x4000, scoped, tag = 'input window, operand 3, single buffered']
    #allocation7 [shape = 's32[1]{0}', space=sflag, size = 0x4, scoped, tag = 'scoped memory for tpu_custom_call.1']
    #allocation8 [shape = 'u8[1024]{0}', space=vmem, size = 0x400, scoped, tag = 'output window, operand 0']
    %10 = vsyncpa [#allocation4], 0
    %s11 = scalar_lea.sflag [#allocation4], 1
    %12 = vsyncpa %s11, 0
    %13 = vsyncpa [#allocation7], 0
    %14 = vsyncpa [#allocation5], 0
    %s15 = scalar_lea.sflag [#allocation5], 1
    %16 = vsyncpa %s15, 0
    loop: start=0, step=1, limit=4
    $region2: #{tpu_custom_call.1} parent=1 // loop_pre_header
      _
    $region3: #{tpu_custom_call.1} parent=1 // loop_header
      %s18 = sphi 0, %s22
      %p19 = scmp.ge.s32.totalorder %s18, 4
      %s25 = sphi 0, %s37
      %s26 = sphi 0, %s33
      %s27 = sphi 0, %s25
      %s28 = sphi 0, %s26
      %s29 = sphi 0, %s27
      %s30 = sphi 0, %s28
      %s42 = sphi 0, %s44
      %s45 = sphi 0, %s42
      %s46 = sphi 0, %s45
      %s62 = sphi 0, %s46
      %s70 = sphi 0, %s72
      %s73 = sphi 0, %s70
      %s74 = sphi 0, %s73
      %s90 = sphi 0, %s74
      %s96 = sphi 0, %s98
      %s99 = sphi 0, %s96
      %s100 = sphi 0, %s99
      %s116 = sphi 0, %s100
      %s120 = sphi 0, %s120
      %s122 = sphi 0, %s120
      %s123 = sphi 0, %s122
      %s137 = sphi 0, %s123
      %s141 = sphi 0, %s141
      %s143 = sphi 0, %s141
      %s144 = sphi 0, %s143
      %s158 = sphi 0, %s144
      %s164 = sphi 0, %s166
      %s167 = sphi 0, %s164
      %s168 = sphi 0, %s167
      %s184 = sphi 0, %s168
    $region4: #{tpu_custom_call.1} parent=1 // loop_header_branch
      %21 = sbr.rel (%p19) target = $region8
    $region5: #{tpu_custom_call.1} parent=1 // loop_body
      %s23 = ssub.s32 %s18, 1
      %s24 = ssub.s32 %s18, 2
      %s31 = sadd.s32 1, %s26
      %p32 = scmp.ge.s32.totalorder %s31, 1
      %s33 = scalar_select %p32, 0, %s31
      %s34 = sadd.s32 1, %s25
      %s35 = scalar_select %p32, %s34, %s25
      %p36 = scmp.ge.s32.totalorder %s35, 2
      %s37 = scalar_select %p36, 0, %s35
      %s38 = ssub.s32 %s25, %s37
      %s39 = ssub.s32 %s26, %s33
      %s40 = sor.u32 %s38, %s39
      %p41 = scmp.eq.s32.totalorder %s40, 0
      %s43 = sadd.s32 %s42, 1
      %s44 = scalar_select %p41, %s42, %s43
      %p47 = pneg %p41
      %p48 = scmp.eq.s32.totalorder %s18, 1
      %p49 = por %p47, %p48
      %p50 = scmp.ne.s32.totalorder %s42, %s45
      %p51 = scmp.eq.s32.totalorder %s18, 0
      %p52 = por %p50, %p51
      %p53 = scmp.ne.s32.totalorder %s42, %s45
      %p54 = scmp.eq.s32.totalorder %s23, 1
      %p55 = por %p53, %p54
      %p56 = scmp.ne.s32.totalorder %s45, %s46
      %p57 = scmp.eq.s32.totalorder %s23, 0
      %p58 = por %p56, %p57
      %p59 = scmp.ne.s32.totalorder %s45, %s46
      %p60 = scmp.eq.s32.totalorder %s24, 1
      %p61 = por %p59, %p60
      %p63 = scmp.ne.s32.totalorder %s46, %s62
      %p64 = scmp.eq.s32.totalorder %s24, 0
      %p65 = por %p63, %p64
      %s66 = ssub.s32 %s25, %s37
      %s67 = ssub.s32 %s26, %s33
      %s68 = sor.u32 %s66, %s67
      %p69 = scmp.eq.s32.totalorder %s68, 0
      %s71 = sadd.s32 %s70, 1
      %s72 = scalar_select %p69, %s70, %s71
      %p75 = pneg %p69
      %p76 = scmp.eq.s32.totalorder %s18, 1
      %p77 = por %p75, %p76
      %p78 = scmp.ne.s32.totalorder %s70, %s73
      %p79 = scmp.eq.s32.totalorder %s18, 0
      %p80 = por %p78, %p79
      %p81 = scmp.ne.s32.totalorder %s70, %s73
      %p82 = scmp.eq.s32.totalorder %s23, 1
      %p83 = por %p81, %p82
      %p84 = scmp.ne.s32.totalorder %s73, %s74
      %p85 = scmp.eq.s32.totalorder %s23, 0
      %p86 = por %p84, %p85
      %p87 = scmp.ne.s32.totalorder %s73, %s74
      %p88 = scmp.eq.s32.totalorder %s24, 1
      %p89 = por %p87, %p88
      %p91 = scmp.ne.s32.totalorder %s74, %s90
      %p92 = scmp.eq.s32.totalorder %s24, 0
      %p93 = por %p91, %p92
      %s94 = ssub.s32 %s25, %s37
      %p95 = scmp.eq.s32.totalorder %s94, 0
      %s97 = sadd.s32 %s96, 1
      %s98 = scalar_select %p95, %s96, %s97
      %p101 = pneg %p95
      %p102 = scmp.eq.s32.totalorder %s18, 1
      %p103 = por %p101, %p102
      %p104 = scmp.ne.s32.totalorder %s96, %s99
      %p105 = scmp.eq.s32.totalorder %s18, 0
      %p106 = por %p104, %p105
      %p107 = scmp.ne.s32.totalorder %s96, %s99
      %p108 = scmp.eq.s32.totalorder %s23, 1
      %p109 = por %p107, %p108
      %p110 = scmp.ne.s32.totalorder %s99, %s100
      %p111 = scmp.eq.s32.totalorder %s23, 0
      %p112 = por %p110, %p111
      %p113 = scmp.ne.s32.totalorder %s99, %s100
      %p114 = scmp.eq.s32.totalorder %s24, 1
      %p115 = por %p113, %p114
      %p117 = scmp.ne.s32.totalorder %s100, %s116
      %p118 = scmp.eq.s32.totalorder %s24, 0
      %p119 = por %p117, %p118
      %s121 = sadd.s32 %s120, 1
      %p124 = scmp.eq.s32.totalorder %s18, 1
      %p125 = scmp.ne.s32.totalorder %s120, %s122
      %p126 = scmp.eq.s32.totalorder %s18, 0
      %p127 = por %p125, %p126
      %p128 = scmp.ne.s32.totalorder %s120, %s122
      %p129 = scmp.eq.s32.totalorder %s23, 1
      %p130 = por %p128, %p129
      %p131 = scmp.ne.s32.totalorder %s122, %s123
      %p132 = scmp.eq.s32.totalorder %s23, 0
      %p133 = por %p131, %p132
      %p134 = scmp.ne.s32.totalorder %s122, %s123
      %p135 = scmp.eq.s32.totalorder %s24, 1
      %p136 = por %p134, %p135
      %p138 = scmp.ne.s32.totalorder %s123, %s137
      %p139 = scmp.eq.s32.totalorder %s24, 0
      %p140 = por %p138, %p139
      %s142 = sadd.s32 %s141, 1
      %p145 = scmp.eq.s32.totalorder %s18, 1
      %p146 = scmp.ne.s32.totalorder %s141, %s143
      %p147 = scmp.eq.s32.totalorder %s18, 0
      %p148 = por %p146, %p147
      %p149 = scmp.ne.s32.totalorder %s141, %s143
      %p150 = scmp.eq.s32.totalorder %s23, 1
      %p151 = por %p149, %p150
      %p152 = scmp.ne.s32.totalorder %s143, %s144
      %p153 = scmp.eq.s32.totalorder %s23, 0
      %p154 = por %p152, %p153
      %p155 = scmp.ne.s32.totalorder %s143, %s144
      %p156 = scmp.eq.s32.totalorder %s24, 1
      %p157 = por %p155, %p156
      %p159 = scmp.ne.s32.totalorder %s144, %s158
      %p160 = scmp.eq.s32.totalorder %s24, 0
      %p161 = por %p159, %p160
      %s162 = ssub.s32 %s25, %s37
      %p163 = scmp.eq.s32.totalorder %s162, 0
      %s165 = sadd.s32 %s164, 1
      %s166 = scalar_select %p163, %s164, %s165
      %p169 = pneg %p163
      %p170 = scmp.eq.s32.totalorder %s18, 1
      %p171 = por %p169, %p170
      %p172 = scmp.ne.s32.totalorder %s164, %s167
      %p173 = scmp.eq.s32.totalorder %s18, 0
      %p174 = por %p172, %p173
      %p175 = scmp.ne.s32.totalorder %s164, %s167
      %p176 = scmp.eq.s32.totalorder %s23, 1
      %p177 = por %p175, %p176
      %p178 = scmp.ne.s32.totalorder %s167, %s168
      %p179 = scmp.eq.s32.totalorder %s23, 0
      %p180 = por %p178, %p179
      %p181 = scmp.ne.s32.totalorder %s167, %s168
      %p182 = scmp.eq.s32.totalorder %s24, 1
      %p183 = por %p181, %p182
      %p185 = scmp.ne.s32.totalorder %s168, %s184
      %p186 = scmp.eq.s32.totalorder %s24, 0
      %p187 = por %p185, %p186
      %p188 = scmp.le.s32.totalorder 1, %s18
      %p189 = scmp.lt.s32.totalorder %s18, 3
      %p190 = pnand %p188, %p189
      %p191 = pneg %p190
      // Predicated region
      $region9: #{tpu_custom_call.1} parent=5 // pred_check
        _
      $region10: #{tpu_custom_call.1} parent=5 // pred_check_branch
        %193 = sbr.rel (%p190) target = $region12
      $region11: #{tpu_custom_call.1} parent=5 // pred_region
        %s194 = ssub.s32 %s18, 1
        // Predicated region
        $region13: #{tpu_custom_call.1} parent=11 // pred_check
          %p195 = pneg %p133
        $region14: #{tpu_custom_call.1} parent=11 // pred_check_branch
          %197 = sbr.rel (%p195) target = $region16
        $region15: #{tpu_custom_call.1} parent=11 // pred_region
          %s199 = ssub.s32 512, 512
          %200 = vsyncadd [#allocation7], %s199
          %s201 = sshll.u32 [#allocation6], 4
          %s202 = int_to_ptr.vmem [resolvable:$true] %s201
          %207 = dma.hbm_to_vmem [thread:$0]  %s3, 512, %s202, [#allocation7], 128, 128, 8
        $region16: #{tpu_custom_call.1} parent=11 // pred_fallthru
          _
        // Predicated region
        $region17: #{tpu_custom_call.1} parent=11 // pred_check
          %p208 = pneg %p154
        $region18: #{tpu_custom_call.1} parent=11 // pred_check_branch
          %210 = sbr.rel (%p208) target = $region20
        $region19: #{tpu_custom_call.1} parent=11 // pred_region
          _
        $region20: #{tpu_custom_call.1} parent=11 // pred_fallthru
          _
      $region12: #{tpu_custom_call.1} parent=5 // pred_fallthru
        _
      %p211 = scmp.lt.s32.totalorder %s18, 2
      // Predicated region
      $region21: #{tpu_custom_call.1} parent=5 // pred_check
        %p212 = pneg %p211
      $region22: #{tpu_custom_call.1} parent=5 // pred_check_branch
        %214 = sbr.rel (%p212) target = $region24
      $region23: #{tpu_custom_call.1} parent=5 // pred_region
        // Predicated region
        $region25: #{tpu_custom_call.1} parent=23 // pred_check
          %p215 = pneg %p52
        $region26: #{tpu_custom_call.1} parent=23 // pred_check_branch
          %217 = sbr.rel (%p215) target = $region28
        $region27: #{tpu_custom_call.1} parent=23 // pred_region
          %s218 = sand.u32 %s42, 1
          %s219 = scalar_lea.sflag [#allocation4], %s218
          %s220 = sand.u32 %s42, 1
          %s221 = smul.addr %s220, 4
          %s222 = scalar_lea.vmem [#allocation3], %s221
          %s224 = ssub.s32 64, 64
          %225 = vsyncadd %s219, %s224
          %s226 = sadd.s32 %s26, %s25
          %s227 = smul.addr %s226, 64
          %s228 = scalar_lea.hbm %s0, %s227
          %s230 = sshll.u32 %s222, 4
          %s231 = int_to_ptr.vmem [resolvable:$true] %s230
          %233 = dma.hbm_to_vmem [thread:$0]  %s228, 64, %s231, %s219
        $region28: #{tpu_custom_call.1} parent=23 // pred_fallthru
          _
        // Predicated region
        $region29: #{tpu_custom_call.1} parent=23 // pred_check
          %p234 = pneg %p80
        $region30: #{tpu_custom_call.1} parent=23 // pred_check_branch
          %236 = sbr.rel (%p234) target = $region32
        $region31: #{tpu_custom_call.1} parent=23 // pred_region
          %p237 = scmp.lt.s32.totalorder %s25, 1
          %s238 = scalar_select %p237, %s25, 1
          %p239 = scmp.lt.s32.totalorder %s26, 0
          %s240 = scalar_select %p239, %s26, 0
          %s241 = sadd.s32 %s240, %s238
          %s242 = scalar_lea.vmem %s1, %s241
        $region32: #{tpu_custom_call.1} parent=23 // pred_fallthru
          _
        // Predicated region
        $region33: #{tpu_custom_call.1} parent=23 // pred_check
          %p243 = pneg %p106
        $region34: #{tpu_custom_call.1} parent=23 // pred_check_branch
          %245 = sbr.rel (%p243) target = $region36
        $region35: #{tpu_custom_call.1} parent=23 // pred_region
          %p246 = scmp.lt.s32.totalorder %s25, 1
          %s247 = scalar_select %p246, %s25, 1
          %s248 = scalar_lea.vmem %s2, %s247
        $region36: #{tpu_custom_call.1} parent=23 // pred_fallthru
          _
      $region24: #{tpu_custom_call.1} parent=5 // pred_fallthru
        _
      %p249 = scmp.le.s32.totalorder 1, %s18
      %p250 = scmp.lt.s32.totalorder %s18, 3
      %p251 = pnand %p249, %p250
      %p252 = pneg %p251
      // Predicated region
      $region37: #{tpu_custom_call.1} parent=5 // pred_check
        _
      $region38: #{tpu_custom_call.1} parent=5 // pred_check_branch
        %254 = sbr.rel (%p251) target = $region40
      $region39: #{tpu_custom_call.1} parent=5 // pred_region
        %s255 = ssub.s32 %s18, 1
        %s256 = sand.u32 %s45, 1
        %s257 = scalar_lea.sflag [#allocation4], %s256
        %s258 = sand.u32 %s45, 1
        %s259 = smul.addr %s258, 4
        %s260 = scalar_lea.vmem [#allocation3], %s259
        // Predicated region
        $region41: #{tpu_custom_call.1} parent=39 // pred_check
          %p261 = pneg %p58
        $region42: #{tpu_custom_call.1} parent=39 // pred_check_branch
          %263 = sbr.rel (%p261) target = $region44
        $region43: #{tpu_custom_call.1} parent=39 // pred_region
          %264 = dma.done %s257, 64
        $region44: #{tpu_custom_call.1} parent=39 // pred_fallthru
          _
        // Predicated region
        $region45: #{tpu_custom_call.1} parent=39 // pred_check
          %p265 = pneg %p133
        $region46: #{tpu_custom_call.1} parent=39 // pred_check_branch
          %267 = sbr.rel (%p265) target = $region48
        $region47: #{tpu_custom_call.1} parent=39 // pred_region
          %268 = dma.done [#allocation7], 512
        $region48: #{tpu_custom_call.1} parent=39 // pred_fallthru
          _
        %s269 = sand.u32 %s45, 1
        %s270 = scalar_lea.sflag [#allocation4], %s269
        %s271 = sand.u32 %s45, 1
        %s272 = smul.addr %s271, 4
        %s273 = scalar_lea.vmem [#allocation3], %s272
        %p274 = pneg %p58
        %p275 = pneg %p55
        %p276 = scmp.lt.s32.totalorder %s27, 1
        %s277 = scalar_select %p276, %s27, 1
        %p278 = scmp.lt.s32.totalorder %s28, 0
        %s279 = scalar_select %p278, %s28, 0
        %s280 = sadd.s32 %s279, %s277
        %s281 = scalar_lea.vmem %s1, %s280
        %p282 = pneg %p86
        %p283 = pneg %p83
        %p284 = scmp.lt.s32.totalorder %s27, 1
        %s285 = scalar_select %p284, %s27, 1
        %s286 = scalar_lea.vmem %s2, %s285
        %p287 = pneg %p112
        %p288 = pneg %p109
        %p289 = pneg %p133
        %p290 = pneg %p130
        %p291 = pneg %p154
        %p292 = pneg %p151
        %p293 = pneg %p180
        %p294 = pneg %p177
        %s295 = sand.u32 %s167, 1
        %s296 = scalar_lea.sflag [#allocation5], %s295
        %s297 = sand.u32 %s167, 1
        %s298 = scalar_lea.vmem [#allocation8], %s297
        %p299 = scmp.lt.s32.totalorder %s27, 1
        %s300 = scalar_select %p299, %s27, 1
        %p301 = scmp.lt.s32.totalorder %s28, 0
        %s302 = scalar_select %p301, %s28, 0
        %s303 = sadd.s32 %s302, %s300
        %s304 = scalar_lea.vmem %s1, %s303
        %p305 = scmp.lt.s32.totalorder %s27, 1
        %s306 = scalar_select %p305, %s27, 1
        %s307 = scalar_lea.vmem %s2, %s306
        %p309 = scmp.eq.s32.totalorder %s28, 0
        // Predicated region
        $region49: #{tpu_custom_call.1} parent=39 // pred_check
          %p310 = pneg %p309
        $region50: #{tpu_custom_call.1} parent=39 // pred_check_branch
          %312 = sbr.rel (%p310) target = $region52
        $region51: #{tpu_custom_call.1} parent=39 // pred_region
          %vm313 = vcmask 253952
          %314 = vst.msk [vmem:[#allocation2] sm:$0x1] %vm313, 0.0
        $region52: #{tpu_custom_call.1} parent=39 // pred_fallthru
          _
        %v315 = vld [vmem:[%s304] sm:$0x1]
        %v316 = vld [vmem:[%s260] sm:$0xf]
        %vm317 = vcmask 64512
        %v319 = vsel %vm317, %v315, 0
        %vm321 = vcmask 1043456
        %v323 = vsel %vm321, %v316, 0
        %325 = vmatprep.subr.bf16.mxu0 0
        %326 = vmatpush1.bf16.msra.mxu0 %v323
        %327 = vmatprep.subr.bf16.mxu0 0
        %328 = vmatpush1.bf16.msra.mxu0 0
        %329 = vmatprep.subr.bf16.mxu0 0
        %330 = vmatpush1.bf16.msra.mxu0 0
        %331 = vmatprep.subr.bf16.mxu0 0
        %332 = vmatpush1.bf16.msra.mxu0 0
        %333 = vmatprep.subr.bf16.mxu0 0
        %334 = vmatpush1.bf16.msra.mxu0 0
        %335 = vmatprep.subr.bf16.mxu0 0
        %336 = vmatpush1.bf16.msra.mxu0 0
        %337 = vmatprep.subr.bf16.mxu0 0
        %338 = vmatpush1.bf16.msra.mxu0 0
        %339 = vmatprep.subr.bf16.mxu0 0
        %340 = vmatpush1.bf16.msra.mxu0 0
        %341 = vmatprep.subr.bf16.mxu0 0
        %342 = vmatpush1.bf16.msra.mxu0 0
        %343 = vmatprep.subr.bf16.mxu0 0
        %344 = vmatpush1.bf16.msra.mxu0 0
        %345 = vmatprep.subr.bf16.mxu0 0
        %346 = vmatpush1.bf16.msra.mxu0 0
        %347 = vmatprep.subr.bf16.mxu0 0
        %348 = vmatpush1.bf16.msra.mxu0 0
        %349 = vmatprep.subr.bf16.mxu0 0
        %350 = vmatpush1.bf16.msra.mxu0 0
        %351 = vmatprep.subr.bf16.mxu0 0
        %352 = vmatpush1.bf16.msra.mxu0 0
        %353 = vmatprep.subr.bf16.mxu0 0
        %354 = vmatpush1.bf16.msra.mxu0 0
        %355 = vmatprep.subr.bf16.mxu0 0
        %356 = vmatpush1.bf16.msra.mxu0 0
        %357 = vmatprep.mubr.bf16.mxu0 0
        %358 = vmatmul.mubr.bf16.gmra.mrb[0].mxu0 %v319
        %v359 = vpop.f32.mrb[0].mxu0
        %v360 = vadd.f32 0.0, %v359
        %v361 = vpop.f32.mrb[0].mxu0
        %v362 = vpop.f32.mrb[0].mxu0
        %v363 = vpop.f32.mrb[0].mxu0
        %364 = vdwg.mxu0
        %v365 = vld [vmem:[#allocation2] sm:$0x1]
        %v366 = vadd.f32 %v365, %v360
        %vm367 = vcmask 253952
        %368 = vst.msk [vmem:[#allocation2] sm:$0x1] %vm367, %v366
        // Predicated region
        $region53: #{tpu_custom_call.1} parent=39 // pred_check
          %p369 = pneg %p309
        $region54: #{tpu_custom_call.1} parent=39 // pred_check_branch
          %371 = sbr.rel (%p369) target = $region56
        $region55: #{tpu_custom_call.1} parent=39 // pred_region
          %v372 = vld [vmem:[%s307] sm:$0x1]
          %v373 = vld [vmem:[#allocation2] sm:$0x1]
          %375 = vset.pattern.permute.xlu0 0
          %376 = vperm.xlu0 %375, %v372
          %v377 = vpop.permute.xlu0 %376
          %v379 = vlaneseq
          %v380 = vshrl.u32 %v379, 7
          %v381 = vsub.s32 0, %v380
          %v382 = vrot.slane %v377, %v381
          %v383 = vrcp.pop %v382
          %v384 = vmul.f32 %v373, %v383
          %v385 = vld [vmem:[#allocation6] sm:$0xff]
          %v386 = vld [vmem:[#allocation6 + $0x8] sm:$0xff]
          %v387 = vld [vmem:[#allocation6 + $0x10] sm:$0xff]
          %v388 = vld [vmem:[#allocation6 + $0x18] sm:$0xff]
          %v389 = vld [vmem:[%s4] sm:$0x1]
          %vm390 = vcmask 261120
          %v392 = vsel %vm390, %v384, 0
          %394 = vmatprep.subr.mxu0 0.0
          %395 = vmatpush1.msra.mxu0 %v385
          %396 = vmatprep.subr.mxu0 0.0
          %397 = vmatpush1.msra.mxu0 %v386
          %398 = vmatprep.subr.mxu0 0.0
          %399 = vmatpush1.msra.mxu0 %v387
          %400 = vmatprep.subr.mxu0 0.0
          %401 = vmatpush1.msra.mxu0 %v388
          %402 = vmatprep.subr.mxu0 0.0
          %403 = vmatpush1.msra.mxu0 0.0
          %404 = vmatprep.subr.mxu0 0.0
          %405 = vmatpush1.msra.mxu0 0.0
          %406 = vmatprep.subr.mxu0 0.0
          %407 = vmatpush1.msra.mxu0 0.0
          %408 = vmatprep.subr.mxu0 0.0
          %409 = vmatpush1.msra.mxu0 0.0
          %410 = vmatprep.subr.mxu0 0.0
          %411 = vmatpush1.msra.mxu0 0.0
          %412 = vmatprep.subr.mxu0 0.0
          %413 = vmatpush1.msra.mxu0 0.0
          %414 = vmatprep.subr.mxu0 0.0
          %415 = vmatpush1.msra.mxu0 0.0
          %416 = vmatprep.subr.mxu0 0.0
          %417 = vmatpush1.msra.mxu0 0.0
          %418 = vmatprep.subr.mxu0 0.0
          %419 = vmatpush1.msra.mxu0 0.0
          %420 = vmatprep.subr.mxu0 0.0
          %421 = vmatpush1.msra.mxu0 0.0
          %422 = vmatprep.subr.mxu0 0.0
          %423 = vmatpush1.msra.mxu0 0.0
          %424 = vmatprep.subr.mxu0 0.0
          %425 = vmatpush1.msra.mxu0 0.0
          %426 = vmatprep.subr.mxu0 0.0
          %427 = vmatpush1.msra.mxu0 0.0
          %428 = vmatprep.subr.mxu0 0.0
          %429 = vmatpush1.msra.mxu0 0.0
          %430 = vmatprep.subr.mxu0 0.0
          %431 = vmatpush1.msra.mxu0 0.0
          %432 = vmatprep.subr.mxu0 0.0
          %433 = vmatpush1.msra.mxu0 0.0
          %434 = vmatprep.subr.mxu0 0.0
          %435 = vmatpush1.msra.mxu0 0.0
          %436 = vmatprep.subr.mxu0 0.0
          %437 = vmatpush1.msra.mxu0 0.0
          %438 = vmatprep.subr.mxu0 0.0
          %439 = vmatpush1.msra.mxu0 0.0
          %440 = vmatprep.subr.mxu0 0.0
          %441 = vmatpush1.msra.mxu0 0.0
          %442 = vmatprep.subr.mxu0 0.0
          %443 = vmatpush1.msra.mxu0 0.0
          %444 = vmatprep.subr.mxu0 0.0
          %445 = vmatpush1.msra.mxu0 0.0
          %446 = vmatprep.subr.mxu0 0.0
          %447 = vmatpush1.msra.mxu0 0.0
          %448 = vmatprep.subr.mxu0 0.0
          %449 = vmatpush1.msra.mxu0 0.0
          %450 = vmatprep.subr.mxu0 0.0
          %451 = vmatpush1.msra.mxu0 0.0
          %452 = vmatprep.subr.mxu0 0.0
          %453 = vmatpush1.msra.mxu0 0.0
          %454 = vmatprep.subr.mxu0 0.0
          %455 = vmatpush1.msra.mxu0 0.0
          %456 = vmatprep.subr.mxu0 0.0
          %457 = vmatpush1.msra.mxu0 0.0
          %458 = vmatprep.mubr.f32.mxu0 0.0
          %459 = vmatmul.mubr.f32.gmra.mrb[0].mxu0 %v392
          %v460 = vpop.f32.mrb[0].mxu0
          %v461 = vadd.f32 %v389, %v460
          %v462 = vpop.f32.mrb[0].mxu0
          %463 = vdwg.mxu0
          %464 = vst [vmem:[%s298] sm:$0x1] %v461
        $region56: #{tpu_custom_call.1} parent=39 // pred_fallthru
          _
        %s465 = sand.u32 %s167, 1
        %s466 = scalar_lea.sflag [#allocation5], %s465
        %s467 = sand.u32 %s167, 1
        %s468 = scalar_lea.vmem [#allocation8], %s467
        // Predicated region
        $region57: #{tpu_custom_call.1} parent=39 // pred_check
          %p469 = pneg %p177
        $region58: #{tpu_custom_call.1} parent=39 // pred_check_branch
          %471 = sbr.rel (%p469) target = $region60
        $region59: #{tpu_custom_call.1} parent=39 // pred_region
          %s473 = ssub.s32 16, 16
          %474 = vsyncadd %s466, %s473
          %s475 = smul.addr %s27, 16
          %s476 = scalar_lea.hbm %s5, %s475
          %s478 = sshll.u32 %s468, 4
          %s479 = int_to_ptr.vmem [resolvable:$true] %s478
          %481 = dma.vmem_to_hbm [thread:$0]  %s479, 16, %s476, %s466
        $region60: #{tpu_custom_call.1} parent=39 // pred_fallthru
          _
      $region40: #{tpu_custom_call.1} parent=5 // pred_fallthru
        _
      %p482 = scmp.le.s32.totalorder 2, %s18
      // Predicated region
      $region61: #{tpu_custom_call.1} parent=5 // pred_check
        %p483 = pneg %p482
      $region62: #{tpu_custom_call.1} parent=5 // pred_check_branch
        %485 = sbr.rel (%p483) target = $region64
      $region63: #{tpu_custom_call.1} parent=5 // pred_region
        %s486 = ssub.s32 %s18, 2
        // Predicated region
        $region65: #{tpu_custom_call.1} parent=63 // pred_check
          %p487 = pneg %p183
        $region66: #{tpu_custom_call.1} parent=63 // pred_check_branch
          %489 = sbr.rel (%p487) target = $region68
        $region67: #{tpu_custom_call.1} parent=63 // pred_region
          %s490 = sand.u32 %s168, 1
          %s491 = scalar_lea.sflag [#allocation5], %s490
          %s492 = sand.u32 %s168, 1
          %s493 = scalar_lea.vmem [#allocation8], %s492
          %494 = dma.done %s491, 16
        $region68: #{tpu_custom_call.1} parent=63 // pred_fallthru
          _
      $region64: #{tpu_custom_call.1} parent=5 // pred_fallthru
        _
    $region6: #{tpu_custom_call.1} parent=1 // loop_footer
      %s22 = sadd.s32 1, %s18
    $region7: #{tpu_custom_call.1} parent=1 // loop_footer_branch
      %17 = sbr.rel target = $region3
    $region8: #{tpu_custom_call.1} parent=1 // loop_exit
      _
    %495 = vsyncpa [#allocation4], 1
    %s496 = scalar_lea.sflag [#allocation4], 1
    %497 = vsyncpa %s496, 1
    %498 = vsyncpa [#allocation7], 1
    %499 = vsyncpa [#allocation5], 1
    %s500 = scalar_lea.sflag [#allocation5], 1
    %501 = vsyncpa %s500, 1

</llo_original>
